<compile_context>
chip_gen: v5e
topology: v5e:2x2
jax: 0.10.0
libtpu: 0.0.40
codegen_flags: <defaults>
</compile_context>

<pallas_src>
import functools

import jax
import jax.numpy as jnp
from jax.experimental import pallas as pl
from jax.experimental.pallas import tpu as pltpu

_LANES = 128
_SUBLANES = 8
_ROW_ALIGN = 16                 # bf16 sublane tile; also fine for f32
_CHUNK_ALIGN = _ROW_ALIGN * _LANES


def _cdiv(a, b):
    return (a + b - 1) // b


def _round_up(a, b):
    return _cdiv(a, b) * b


# ----------------------------- kernel ---------------------------------------

def _bce_focal_kernel(x_ref, t_ref, w_ref, psum_ref, *, gamma, total, tm,
                      steps, approx_recip, needs_mask):
    """Fused pass: focal weight per element + vector BCE partial sum."""
    j = pl.program_id(1)

    @pl.when(j == 0)
    def _():
        psum_ref[...] = jnp.zeros_like(psum_ref)

    x = x_ref[...].astype(jnp.float32)
    t = t_ref[...].astype(jnp.float32)

    # One exp per element, shared between the BCE term and sigmoid.
    e = jnp.exp(-jnp.abs(x))                          # exp(-|x|) in (0, 1]
    # PyTorch-stable BCEWithLogits: max(x,0) - x*t + log(1 + exp(-|x|))
    bce = jnp.maximum(x, 0.0) - x * t + jnp.log1p(e)

    if approx_recip:
        inv = pl.reciprocal(1.0 + e, approx=True)     # EUP slot, off the VPU
    else:
        inv = 1.0 / (1.0 + e)
    sig = jnp.where(x >= 0, inv, e * inv)             # == sigmoid(x)

    d = jnp.abs(t - sig)
    if gamma == 2.0:
        w = d * d                                     # no pow path
    elif float(gamma) == float(int(gamma)) and gamma >= 0:
        w = d ** int(gamma)                           # integer_pow
    else:
        w = jnp.power(d, jnp.float32(gamma))
    w_ref[...] = w.astype(w_ref.dtype)

    if needs_mask:
        # Zero the BCE contribution of padded / out-of-range elements.  Using
        # a select (not a multiply) so garbage in partial blocks cannot
        # propagate NaNs.  Only traced in when the block coverage != total.
        block_idx = pl.program_id(0) * steps + j
        row0 = block_idx * tm
        rows = jax.lax.broadcasted_iota(jnp.int32, x.shape, 0) + row0
        lanes = jax.lax.broadcasted_iota(jnp.int32, x.shape, 1)
        valid = rows * _LANES + lanes < total
        bce = jnp.where(valid, bce, 0.0)

    # Elementwise (VPU) accumulation into an (8,128) vector; the cross-lane
    # reduction is deferred to the wrapper (done once by XLA).
    partial = jnp.sum(bce.reshape(-1, _SUBLANES, _LANES), axis=0)
    psum_ref[...] += partial.reshape(psum_ref.shape)


# ----------------------------- wrapper ---------------------------------------

def focal_loss(inp, target, *, gamma=2.0, alpha=1.0, tile_rows=2048,
               n_par=1, core_parallel=False, precise=False,
               fast_path_elems=16384):
    """Pallas implementation of FocalLoss.forward (reduction='mean').

    n_par / core_parallel : set n_par=2, core_parallel=True on dual-TC chips
                            (v7x) to shard the reduction across TensorCores.
    precise               : store w in f32 and use the exact reciprocal
                            (bit-comparable to the f32 reference).
    fast_path_elems       : inputs at or below this element count run as one
                            fused XLA expression (launch overhead dominates).
    """
    assert inp.shape == target.shape
    orig_shape = inp.shape
    orig_dtype = inp.dtype
    total = inp.size

    if total == 0:
        return jnp.zeros(orig_shape, orig_dtype)

    if total <= fast_path_elems:
        return _focal_loss_ref(inp, target, gamma=gamma, alpha=alpha)

    x_flat = inp.reshape(-1)
    t_flat = target.reshape(-1)

    if total % _CHUNK_ALIGN == 0:
        padded = total                      # zero-copy path
    else:
        # TODO(synk): avoid this full-array copy for ragged sizes via a manual
        # DMA (pl.ANY) tail path; only hit when total % (16*128) != 0.
        padded = _round_up(total, _CHUNK_ALIGN)
        pad = padded - total
        x_flat = jnp.concatenate([x_flat, jnp.zeros((pad,), x_flat.dtype)])
        t_flat = jnp.concatenate([t_flat, jnp.zeros((pad,), t_flat.dtype)])

    M = padded // _LANES                    # multiple of _ROW_ALIGN
    x2 = x_flat.reshape(M, _LANES)
    t2 = t_flat.reshape(M, _LANES)

    n_par = max(1, min(int(n_par), M // _ROW_ALIGN))
    steps = _cdiv(M, n_par * tile_rows)
    tm = _round_up(_cdiv(M, n_par * steps), _ROW_ALIGN)
    num_blocks = n_par * steps
    needs_mask = (num_blocks * tm * _LANES != total)

    w_dtype = jnp.float32 if precise else jnp.bfloat16

    if n_par > 1:
        sem0 = pltpu.CORE_PARALLEL if core_parallel else pltpu.PARALLEL
    else:
        sem0 = pltpu.ARBITRARY

    kernel = functools.partial(
        _bce_focal_kernel, gamma=gamma, total=total, tm=tm, steps=steps,
        approx_recip=not precise, needs_mask=needs_mask)

    w2, partials = pl.pallas_call(
        kernel,
        out_shape=(
            jax.ShapeDtypeStruct((M, _LANES), w_dtype),
            jax.ShapeDtypeStruct((n_par, _SUBLANES, _LANES), jnp.float32),
        ),
        grid_spec=pltpu.PrefetchScalarGridSpec(
            num_scalar_prefetch=0,
            grid=(n_par, steps),
            in_specs=[
                pl.BlockSpec((tm, _LANES), lambda i, j: (i * steps + j, 0)),
                pl.BlockSpec((tm, _LANES), lambda i, j: (i * steps + j, 0)),
            ],
            out_specs=[
                pl.BlockSpec((tm, _LANES), lambda i, j: (i * steps + j, 0)),
                pl.BlockSpec((1, _SUBLANES, _LANES), lambda i, j: (i, 0, 0)),
            ],
        ),
        compiler_params=pltpu.CompilerParams(
            dimension_semantics=(sem0, pltpu.ARBITRARY),
            vmem_limit_bytes=32 * 1024 * 1024),
    )(x2, t2)

    # Final cross-lane reduction + mean + alpha fold (once, in XLA).
    bce_sum = jnp.sum(partials, dtype=jnp.float32)
    scale = bce_sum * jnp.float32(alpha / total)

    # out = scale * w : scale, f32 upcast, de-pad slice, reshape and dtype
    # cast all fuse into a single XLA elementwise pass over w.
    w_valid = w2.reshape(-1)[:total].astype(jnp.float32)
    return (scale * w_valid).astype(orig_dtype).reshape(orig_shape)


# pure-JAX reference (also used as the small-input fast path)
def _focal_loss_ref(inp, target, gamma=2.0, alpha=1.0):
    x = inp.astype(jnp.float32)
    t = target.astype(jnp.float32)
    bce = jnp.maximum(x, 0.0) - x * t + jnp.log1p(jnp.exp(-jnp.abs(x)))
    mean_bce = jnp.mean(bce)
    out = mean_bce * alpha * jnp.power(jnp.abs(t - jax.nn.sigmoid(x)), gamma)
    return out.astype(inp.dtype)


if __name__ == "__main__":
    key = jax.random.PRNGKey(0)
    k1, k2, k3, k4, k5, k6 = jax.random.split(key, 6)

    # Default (bf16 intermediate + approx reciprocal) tolerances.
    RTOL, ATOL = 2e-2, 2e-3

    # 1) Canonical centernet-style heatmap shape, forced through the Pallas
    #    kernel path (fast_path_elems=0) so the kernel itself is exercised.
    B, C, H, W = 2, 4, 16, 16
    x = jax.random.normal(k1, (B, C, H, W), dtype=jnp.float32)
    tgt = jax.random.uniform(k2, (B, C, H, W), dtype=jnp.float32)
    out = jax.block_until_ready(focal_loss(x, tgt, fast_path_elems=0))
    ref = _focal_loss_ref(x, tgt)
    assert out.shape == (B, C, H, W)
    assert jnp.allclose(out, ref, rtol=RTOL, atol=ATOL), "mismatch (canonical)"

    # 2) Larger aligned heatmap: default kernel path, zero-copy (no padding).
    x2 = jax.random.normal(k3, (2, 4, 64, 64), dtype=jnp.float32)
    t2 = jax.random.uniform(k4, (2, 4, 64, 64), dtype=jnp.float32)
    out2 = jax.block_until_ready(focal_loss(x2, t2))
    ref2 = _focal_loss_ref(x2, t2)
    assert jnp.allclose(out2, ref2, rtol=RTOL, atol=ATOL), "mismatch (aligned)"

    #    Precise mode (f32 intermediate, exact reciprocal) matches tightly.
    out2p = jax.block_until_ready(focal_loss(x2, t2, precise=True))
    assert jnp.allclose(out2p, ref2, rtol=1e-5, atol=1e-5), "mismatch (precise)"

    # 3) Ragged element count (not a multiple of 128): kernel path with
    #    in-kernel masking of the padded tail.
    x3 = jax.random.normal(k5, (3, 5, 41, 37), dtype=jnp.float32)
    t3 = jax.random.uniform(k6, (3, 5, 41, 37), dtype=jnp.float32)
    out3 = jax.block_until_ready(focal_loss(x3, t3))
    ref3 = _focal_loss_ref(x3, t3)
    assert out3.shape == x3.shape
    assert jnp.allclose(out3, ref3, rtol=RTOL, atol=ATOL), "mismatch (ragged)"

    # 4) Tiny ragged input: XLA fast path, exact.
    x4 = jax.random.normal(k1, (2, 3, 7, 5), dtype=jnp.float32)
    t4 = jax.random.uniform(k2, (2, 3, 7, 5), dtype=jnp.float32)
    out4 = jax.block_until_ready(focal_loss(x4, t4))
    assert jnp.allclose(out4, _focal_loss_ref(x4, t4), rtol=1e-5, atol=1e-6), \
        "mismatch (fast path)"

    print("KERNEL_OK")
</pallas_src>

<mosaic_0001>
module attributes {stable_mosaic.version = 11 : i64} {
  func.func @_bce_focal_kernel(%arg0: i32, %arg1: i32, %arg2: memref<16x128xf32, #tpu.memory_space<vmem>>, %arg3: memref<16x128xf32, #tpu.memory_space<vmem>>, %arg4: memref<16x128xbf16, #tpu.memory_space<vmem>>, %arg5: memref<1x8x128xf32, #tpu.memory_space<vmem>>) attributes {dimension_semantics = [#tpu.dimension_semantics<arbitrary>, #tpu.dimension_semantics<arbitrary>], iteration_bounds = array<i64: 1, 1>, scalar_prefetch = 0 : i64, scratch_operands = 0 : i64, tpu.core_type = #tpu.core_type<tc>, window_params = [{transform_indices = @transform_0, window_bounds = array<i64: 16, 128>}, {transform_indices = @transform_1, window_bounds = array<i64: 16, 128>}, {transform_indices = @transform_2, window_bounds = array<i64: 16, 128>}, {transform_indices = @transform_3, window_bounds = array<i64: 1, 8, 128>}]} {
    %c0_i32 = arith.constant 0 : i32
    %0 = arith.cmpi eq, %arg1, %c0_i32 : i32
    %1 = arith.extui %0 : i1 to i32
    %c0_i32_0 = arith.constant 0 : i32
    %2 = arith.cmpi ne, %1, %c0_i32_0 : i32
    scf.if %2 {
      %cst_16 = arith.constant 0.000000e+00 : f32
      %33 = vector.broadcast %cst_16 : f32 to vector<1x8x128xf32>
      %c0_17 = arith.constant 0 : index
      %c0_18 = arith.constant 0 : index
      %c0_19 = arith.constant 0 : index
      %34 = vector.load %arg5[%c0_17, %c0_18, %c0_19] : memref<1x8x128xf32, #tpu.memory_space<vmem>>, vector<1x8x128xf32>
      tpu.vector_store %arg5[%c0_17, %c0_18, %c0_19], %33 {strides = array<i32>} : memref<1x8x128xf32, #tpu.memory_space<vmem>>, vector<1x8x128xf32>,
    } else {
    }
    %c0 = arith.constant 0 : index
    %c0_1 = arith.constant 0 : index
    %3 = vector.load %arg2[%c0, %c0_1] : memref<16x128xf32, #tpu.memory_space<vmem>>, vector<16x128xf32>
    %c0_2 = arith.constant 0 : index
    %c0_3 = arith.constant 0 : index
    %4 = vector.load %arg3[%c0_2, %c0_3] : memref<16x128xf32, #tpu.memory_space<vmem>>, vector<16x128xf32>
    %5 = math.absf %3 : vector<16x128xf32>
    %cst = arith.constant 0.000000e+00 : f32
    %6 = vector.broadcast %cst : f32 to vector<16x128xf32>
    %7 = arith.subf %6, %5 : vector<16x128xf32>
    %8 = math.exp %7 : vector<16x128xf32>
    %cst_4 = arith.constant 0.000000e+00 : f32
    %9 = vector.broadcast %cst_4 : f32 to vector<16x128xf32>
    %10 = arith.maximumf %3, %9 : vector<16x128xf32>
    %11 = arith.mulf %3, %4 : vector<16x128xf32>
    %12 = arith.subf %10, %11 : vector<16x128xf32>
    %13 = math.log1p %8 : vector<16x128xf32>
    %14 = arith.addf %12, %13 : vector<16x128xf32>
    %cst_5 = arith.constant 1.000000e+00 : f32
    %15 = vector.broadcast %cst_5 : f32 to vector<16x128xf32>
    %16 = arith.addf %15, %8 : vector<16x128xf32>
    %17 = tpu.reciprocal %16 {approx = true} : vector<16x128xf32> -> vector<16x128xf32>
    %cst_6 = arith.constant 0.000000e+00 : f32
    %18 = vector.broadcast %cst_6 : f32 to vector<16x128xf32>
    %19 = arith.cmpf oge, %3, %18 : vector<16x128xf32>
    %20 = arith.mulf %8, %17 : vector<16x128xf32>
    %21 = arith.select %19, %17, %20 : vector<16x128xi1>, vector<16x128xf32>
    %22 = arith.subf %4, %21 : vector<16x128xf32>
    %23 = math.absf %22 : vector<16x128xf32>
    %24 = arith.mulf %23, %23 : vector<16x128xf32>
    %25 = arith.truncf %24 : vector<16x128xf32> to vector<16x128xbf16>
    %c0_7 = arith.constant 0 : index
    %c0_8 = arith.constant 0 : index
    %26 = vector.load %arg4[%c0_7, %c0_8] : memref<16x128xbf16, #tpu.memory_space<vmem>>, vector<16x128xbf16>
    tpu.vector_store %arg4[%c0_7, %c0_8], %25 {strides = array<i32>} : memref<16x128xbf16, #tpu.memory_space<vmem>>, vector<16x128xbf16>,
    %27 = vector.shape_cast %14 : vector<16x128xf32> to vector<2x8x128xf32>
    %cst_9 = arith.constant dense<0.000000e+00> : vector<8x128xf32>
    %28 = vector.multi_reduction <add>, %27, %cst_9 [0] : vector<2x8x128xf32> to vector<8x128xf32>
    %c0_10 = arith.constant 0 : index
    %c0_11 = arith.constant 0 : index
    %c0_12 = arith.constant 0 : index
    %29 = vector.load %arg5[%c0_10, %c0_11, %c0_12] : memref<1x8x128xf32, #tpu.memory_space<vmem>>, vector<1x8x128xf32>
    %30 = vector.shape_cast %28 : vector<8x128xf32> to vector<1x8x128xf32>
    %31 = arith.addf %29, %30 : vector<1x8x128xf32>
    %c0_13 = arith.constant 0 : index
    %c0_14 = arith.constant 0 : index
    %c0_15 = arith.constant 0 : index
    %32 = vector.load %arg5[%c0_13, %c0_14, %c0_15] : memref<1x8x128xf32, #tpu.memory_space<vmem>>, vector<1x8x128xf32>
    tpu.vector_store %arg5[%c0_13, %c0_14, %c0_15], %31 {strides = array<i32>} : memref<1x8x128xf32, #tpu.memory_space<vmem>>, vector<1x8x128xf32>,
    return
  }
  func.func @transform_0(%arg0: i32, %arg1: i32) -> (i32, i32) {
    %c1_i32 = arith.constant 1 : i32
    %0 = arith.muli %arg0, %c1_i32 : i32
    %1 = arith.addi %0, %arg1 : i32
    %c0_i32 = arith.constant 0 : i32
    %c0_i32_0 = arith.constant 0 : i32
    return %1, %c0_i32 : i32, i32
  }
  func.func @transform_1(%arg0: i32, %arg1: i32) -> (i32, i32) {
    %c1_i32 = arith.constant 1 : i32
    %0 = arith.muli %arg0, %c1_i32 : i32
    %1 = arith.addi %0, %arg1 : i32
    %c0_i32 = arith.constant 0 : i32
    %c0_i32_0 = arith.constant 0 : i32
    return %1, %c0_i32 : i32, i32
  }
  func.func @transform_2(%arg0: i32, %arg1: i32) -> (i32, i32) {
    %c1_i32 = arith.constant 1 : i32
    %0 = arith.muli %arg0, %c1_i32 : i32
    %1 = arith.addi %0, %arg1 : i32
    %c0_i32 = arith.constant 0 : i32
    %c0_i32_0 = arith.constant 0 : i32
    return %1, %c0_i32 : i32, i32
  }
  func.func @transform_3(%arg0: i32, %arg1: i32) -> (i32, i32, i32) {
    %c0_i32 = arith.constant 0 : i32
    %c0_i32_0 = arith.constant 0 : i32
    %c0_i32_1 = arith.constant 0 : i32
    return %arg0, %c0_i32, %c0_i32_0 : i32, i32, i32
  }
}

</mosaic_0001>

<llo_original>
// kernel: tpu_custom_call.1
$region0: #{tpu_custom_call.1}
  #allocation0 [shape = 'u32[]', space=smem, size = 0x4, offset = 0x4, fixed_abs, tag = 'smem constant byte address 0x4 - core index']
  #allocation1 [shape = 'u32[72,128]{1,0:T(1,128)}', space=vmem, size = 0x9000, scoped, tag = 'internal scratch']
  %s0 = inlined_call_operand.hbm [shape: f32[16,128], index: 0, kind: input, shape index: {}]
  %s1 = inlined_call_operand.hbm [shape: f32[16,128], index: 1, kind: input, shape index: {}]
  %s2 = inlined_call_operand.hbm [shape: bf16[16,128], index: 2, kind: output, shape index: {0}]
  %s3 = inlined_call_operand.hbm [shape: f32[1,8,128], index: 3, kind: output, shape index: {1}]
  %4 = xla_tuple %s2, %s3
  %s5 = sld [smem:[#allocation0]]
  $region38: #{tpu_custom_call.1} parent=0
    _
  %s7 = ssub.s32 1, %s5
  %s8 = scalar_select 0, %s7, %s5
  $region1: #{tpu_custom_call.1} parent=0
    #allocation2 [shape = 'u8[8192]{0}', space=vmem, size = 0x2000, scoped, tag = 'input window, operand 0, single buffered']
    #allocation3 [shape = 's32[1]{0}', space=sflag, size = 0x4, scoped, tag = 'scoped memory for tpu_custom_call.1']
    #allocation4 [shape = 's32[1]{0}', space=sflag, size = 0x4, scoped, tag = 'scoped memory for tpu_custom_call.1']
    #allocation5 [shape = 'u8[8192]{0}', space=vmem, size = 0x2000, scoped, tag = 'input window, operand 1, single buffered']
    #allocation6 [shape = 's32[1]{0}', space=sflag, size = 0x4, scoped, tag = 'scoped memory for tpu_custom_call.1']
    #allocation7 [shape = 'u8[4096]{0}', space=vmem, size = 0x1000, scoped, tag = 'output window, operand 0, single buffered']
    #allocation8 [shape = 'u8[4096]{0}', space=vmem, size = 0x1000, scoped, tag = 'output window, operand 1, single buffered']
    #allocation9 [shape = 's32[1]{0}', space=sflag, size = 0x4, scoped, tag = 'scoped memory for tpu_custom_call.1']
    %9 = vsyncpa [#allocation3], 0
    %10 = vsyncpa [#allocation6], 0
    %11 = vsyncpa [#allocation4], 0
    %12 = vsyncpa [#allocation9], 0
    // Predicated region
    $region2: #{tpu_custom_call.1} parent=1 // pred_check
      _
    $region3: #{tpu_custom_call.1} parent=1 // pred_check_branch
      %14 = sbr.rel (0) target = $region5
    $region4: #{tpu_custom_call.1} parent=1 // pred_region
      %s15 = sadd.s32 0, 0
      %s16 = smul.u32 2, %s15
      %18 = vsyncadd [#allocation3], 0
      %s19 = smul.addr %s16, 8
      %s20 = scalar_lea.hbm %s0, %s19
      %s21 = sshll.u32 %s20, 4
      %s22 = int_to_ptr.hbm [resolvable:$true] %s21
      %s23 = sshll.u32 [#allocation2], 4
      %s24 = int_to_ptr.vmem [resolvable:$true] %s23
      %29 = dma.hbm_to_vmem [thread:$0]  %s22, 256, %s24, [#allocation3], 128, 128, 8
    $region5: #{tpu_custom_call.1} parent=1 // pred_fallthru
      _
    // Predicated region
    $region6: #{tpu_custom_call.1} parent=1 // pred_check
      _
    $region7: #{tpu_custom_call.1} parent=1 // pred_check_branch
      %31 = sbr.rel (0) target = $region9
    $region8: #{tpu_custom_call.1} parent=1 // pred_region
      %s32 = sadd.s32 0, 0
      %s33 = smul.u32 2, %s32
      %35 = vsyncadd [#allocation6], 0
      %s36 = smul.addr %s33, 8
      %s37 = scalar_lea.hbm %s1, %s36
      %s38 = sshll.u32 %s37, 4
      %s39 = int_to_ptr.hbm [resolvable:$true] %s38
      %s40 = sshll.u32 [#allocation5], 4
      %s41 = int_to_ptr.vmem [resolvable:$true] %s40
      %46 = dma.hbm_to_vmem [thread:$0]  %s39, 256, %s41, [#allocation6], 128, 128, 8
    $region9: #{tpu_custom_call.1} parent=1 // pred_fallthru
      _
    // Predicated region
    $region10: #{tpu_custom_call.1} parent=1 // pred_check
      _
    $region11: #{tpu_custom_call.1} parent=1 // pred_check_branch
      %48 = sbr.rel (0) target = $region13
    $region12: #{tpu_custom_call.1} parent=1 // pred_region
      %50 = dma.done [#allocation3], 256
    $region13: #{tpu_custom_call.1} parent=1 // pred_fallthru
      _
    // Predicated region
    $region14: #{tpu_custom_call.1} parent=1 // pred_check
      _
    $region15: #{tpu_custom_call.1} parent=1 // pred_check_branch
      %52 = sbr.rel (0) target = $region17
    $region16: #{tpu_custom_call.1} parent=1 // pred_region
      %54 = dma.done [#allocation6], 256
    $region17: #{tpu_custom_call.1} parent=1 // pred_fallthru
      _
    %s55 = sadd.s32 0, 0
    %s56 = smul.u32 2, %s55
    %s57 = sadd.s32 0, 0
    %s58 = smul.u32 2, %s57
    %s59 = sadd.s32 0, 0
    %s60 = smul.u32 2, %s59
    %p61 = scmp.eq.s32.totalorder 0, 0
    // Predicated region
    $region18: #{tpu_custom_call.1} parent=1 // pred_check
      %p62 = pneg %p61
    $region19: #{tpu_custom_call.1} parent=1 // pred_check_branch
      %64 = sbr.rel (%p62) target = $region21
    $region20: #{tpu_custom_call.1} parent=1 // pred_region
      %65 = vst [vmem:[#allocation8] sm:$0xff] 0.0
    $region21: #{tpu_custom_call.1} parent=1 // pred_fallthru
      _
    %v66 = vld [vmem:[#allocation2] sm:$0xff]
    %v67 = vld [vmem:[#allocation2 + $0x8] sm:$0xff]
    %v68 = vld [vmem:[#allocation5] sm:$0xff]
    %v69 = vld [vmem:[#allocation5 + $0x8] sm:$0xff]
    %v70 = vand.u32 2147483647, %v66
    %v71 = vand.u32 2147483647, %v67
    %v72 = vsub.f32 0.0, %v70
    %v73 = vsub.f32 0.0, %v71
    %v74 = vmul.f32 %v72, 1.442695
    %v75 = vpow.pop %v74
    %v76 = vmul.f32 %v73, 1.442695
    %v77 = vpow.pop %v76
    %v78 = vmax.f32 %v66, 0.0
    %v79 = vmax.f32 %v67, 0.0
    %v80 = vmul.f32 %v66, %v68
    %v81 = vmul.f32 %v67, %v69
    %v82 = vsub.f32 %v78, %v80
    %v83 = vsub.f32 %v79, %v81
    %v84 = vadd.f32 %v75, 1.0
    %v85 = vlog2.pop %v84
    %v86 = vmul.f32 %v85, 0.6931472
    %v87 = vmul.f32 -0.5, %v75
    %v88 = vadd.f32 %v87, 1.0
    %v89 = vmul.f32 %v88, %v75
    %v90 = vand.u32 2147483647, %v75
    %vm91 = vcmp.lt.f32.partialorder %v90, 0.0004427343
    %v92 = vsel %vm91, %v89, %v86
    %v93 = vadd.f32 %v77, 1.0
    %v94 = vlog2.pop %v93
    %v95 = vmul.f32 %v94, 0.6931472
    %v96 = vmul.f32 -0.5, %v77
    %v97 = vadd.f32 %v96, 1.0
    %v98 = vmul.f32 %v97, %v77
    %v99 = vand.u32 2147483647, %v77
    %vm100 = vcmp.lt.f32.partialorder %v99, 0.0004427343
    %v101 = vsel %vm100, %v98, %v95
    %v102 = vadd.f32 %v82, %v92
    %v103 = vadd.f32 %v83, %v101
    %v104 = vadd.f32 %v75, 1.0
    %v105 = vadd.f32 %v77, 1.0
    %v106 = vrcp.pop %v104
    %v107 = vrcp.pop %v105
    %vm108 = vcmp.ge.f32.partialorder %v66, 0.0
    %vm109 = vcmp.ge.f32.partialorder %v67, 0.0
    %v110 = vmul.f32 %v75, %v106
    %v111 = vmul.f32 %v77, %v107
    %v112 = vsel %vm108, %v106, %v110
    %v113 = vsel %vm109, %v107, %v111
    %v114 = vsub.f32 %v68, %v112
    %v115 = vsub.f32 %v69, %v113
    %v116 = vand.u32 2147483647, %v114
    %v117 = vand.u32 2147483647, %v115
    %v118 = vmul.f32 %v116, %v116
    %v119 = vmul.f32 %v117, %v117
    %v120 = vpack.c.bf16 %v118, %v118
    %v121 = vpack.c.bf16 %v119, %v119
    %122 = vst [vmem:[#allocation7] sm:$0xf] %v120
    %123 = vst [vmem:[#allocation7 + $0x4] sm:$0xf] %v121
    %v124 = vadd.f32 %v102, %v103
    %v125 = vld [vmem:[#allocation8] sm:$0xff]
    %v126 = vadd.f32 %v125, %v124
    %127 = vst [vmem:[#allocation8] sm:$0xff] %v126
    // Predicated region
    $region22: #{tpu_custom_call.1} parent=1 // pred_check
      _
    $region23: #{tpu_custom_call.1} parent=1 // pred_check_branch
      %129 = sbr.rel (0) target = $region25
    $region24: #{tpu_custom_call.1} parent=1 // pred_region
      %s130 = sadd.s32 0, 0
      %s131 = smul.u32 2, %s130
      %133 = vsyncadd [#allocation4], 0
      %s134 = smul.addr %s131, 4
      %s135 = scalar_lea.hbm %s2, %s134
      %s136 = sshll.u32 [#allocation7], 4
      %s137 = int_to_ptr.vmem [resolvable:$true] %s136
      %s138 = sshll.u32 %s135, 4
      %s139 = int_to_ptr.hbm [resolvable:$true] %s138
      %144 = dma.vmem_to_hbm [thread:$0]  %s137, 128, %s139, [#allocation4], 64, 64, 4
    $region25: #{tpu_custom_call.1} parent=1 // pred_fallthru
      _
    // Predicated region
    $region26: #{tpu_custom_call.1} parent=1 // pred_check
      _
    $region27: #{tpu_custom_call.1} parent=1 // pred_check_branch
      %146 = sbr.rel (0) target = $region29
    $region28: #{tpu_custom_call.1} parent=1 // pred_region
      %148 = vsyncadd [#allocation9], 0
      %s150 = sshll.u32 [#allocation8], 4
      %s151 = int_to_ptr.vmem [resolvable:$true] %s150
      %s152 = sshll.u32 %s3, 4
      %s153 = int_to_ptr.hbm [resolvable:$true] %s152
      %155 = dma.vmem_to_hbm [thread:$0]  %s151, 128, %s153, [#allocation9]
    $region29: #{tpu_custom_call.1} parent=1 // pred_fallthru
      _
    // Predicated region
    $region30: #{tpu_custom_call.1} parent=1 // pred_check
      _
    $region31: #{tpu_custom_call.1} parent=1 // pred_check_branch
      %157 = sbr.rel (0) target = $region33
    $region32: #{tpu_custom_call.1} parent=1 // pred_region
      %159 = dma.done [#allocation4], 128
    $region33: #{tpu_custom_call.1} parent=1 // pred_fallthru
      _
    // Predicated region
    $region34: #{tpu_custom_call.1} parent=1 // pred_check
      _
    $region35: #{tpu_custom_call.1} parent=1 // pred_check_branch
      %161 = sbr.rel (0) target = $region37
    $region36: #{tpu_custom_call.1} parent=1 // pred_region
      %163 = dma.done [#allocation9], 128
    $region37: #{tpu_custom_call.1} parent=1 // pred_fallthru
      _
    %164 = vsyncpa [#allocation3], 1
    %165 = vsyncpa [#allocation6], 1
    %166 = vsyncpa [#allocation4], 1
    %167 = vsyncpa [#allocation9], 1

</llo_original>
